<compile_context>
chip_gen: v6e
topology: v6e:2x2x1
jax: 0.10.0
libtpu: 0.0.40
codegen_flags: <defaults>
</compile_context>

<pallas_src>
import functools

import numpy as np
import jax
import jax.numpy as jnp
from jax.experimental import pallas as pl
from jax.experimental.pallas import tpu as pltpu

_LN_EPS = 1e-5


def _round_up(x, m):
    return (x + m - 1) // m * m


def _row_align(dt):
    return 16 if np.dtype(dt) == np.dtype(jnp.bfloat16) else 8


@functools.lru_cache(maxsize=1)
def _vmem_limit_bytes():
    """Per-generation VMEM budget: ~112 MiB on v5e/v6e (128 MiB phys), ~48 MiB on v7x (64 MiB phys)."""
    try:
        cap = int(pltpu.get_tpu_info().vmem_capacity_bytes)
    except Exception:
        return None
    return max(32 * 1024 * 1024, min(cap - 16 * 1024 * 1024, 112 * 1024 * 1024))


def _layernorm_f32(x, gamma, beta, eps):
    m = jnp.mean(x, axis=-1, keepdims=True)
    c = x - m
    var = jnp.mean(c * c, axis=-1, keepdims=True)
    return c * jax.lax.rsqrt(var + eps) * gamma + beta


# ---------------------------------------------------------------------------
# One-time weight packing (kept out of the per-call path; feedback #7)
# ---------------------------------------------------------------------------
def pack_params(p, compute_dtype=None):
    d, num_heads, head_dim = p["wq"].shape
    mlp_dim = p["w1"].shape[1]
    hd = num_heads * head_dim
    cdt = compute_dtype or p["wq"].dtype
    # (D, H, Dh) -> (D, H*Dh); concat Q|K|V along the output axis -> (D, 3*H*Dh).
    wqkv = jnp.concatenate(
        [p["wq"].reshape(d, hd), p["wk"].reshape(d, hd), p["wv"].reshape(d, hd)],
        axis=1).astype(cdt)
    bqkv = jnp.concatenate(
        [p["bq"].reshape(hd), p["bk"].reshape(hd), p["bv"].reshape(hd)]
    ).reshape(1, 3 * hd).astype(jnp.float32)
    return dict(
        num_heads=int(num_heads), head_dim=int(head_dim),
        ln1_g=p["ln1_g"].reshape(1, d).astype(jnp.float32),
        ln1_b=p["ln1_b"].reshape(1, d).astype(jnp.float32),
        wqkv=wqkv, bqkv=bqkv,
        wo=p["wo"].reshape(hd, d).astype(cdt),
        bo=p["bo"].reshape(1, d).astype(jnp.float32),
        ln2_g=p["ln2_g"].reshape(1, d).astype(jnp.float32),
        ln2_b=p["ln2_b"].reshape(1, d).astype(jnp.float32),
        w1=p["w1"].astype(cdt),
        b1=p["b1"].reshape(1, mlp_dim).astype(jnp.float32),
        w2=p["w2"].astype(cdt),
        b2=p["b2"].reshape(1, d).astype(jnp.float32),
    )


# ---------------------------------------------------------------------------
# Kernel 1: LN1 + fused-QKV multi-head attention + fused output proj + residual
# ---------------------------------------------------------------------------
def _attn_block_kernel(x_ref, g1_ref, be1_ref, wqkv_ref, bqkv_ref, wo_ref, bo_ref,
                       o_ref, q_s, k_s, v_s, att_s,
                       *, num_heads, head_dim, scale_inv, eps):
    h = pl.program_id(1)
    hd = num_heads * head_dim

    @pl.when(h == 0)
    def _():
        # LN1 + single full-width QKV projection, staged per-head into scratch.
        x = x_ref[0].astype(jnp.float32)
        xn = _layernorm_f32(x, g1_ref[...], be1_ref[...], eps)
        qkv = jnp.dot(xn.astype(wqkv_ref.dtype), wqkv_ref[...],
                      preferred_element_type=jnp.float32)
        qkv = (qkv + bqkv_ref[...]).astype(q_s.dtype)
        for hh in range(num_heads):                     # static lane slices
            lo = hh * head_dim
            q_s[hh] = qkv[:, lo:lo + head_dim]
            k_s[hh] = qkv[:, hd + lo:hd + lo + head_dim]
            v_s[hh] = qkv[:, 2 * hd + lo:2 * hd + lo + head_dim]

    # One head per grid step: only this head's (seq, seq) tile is live.
    q = q_s[h]
    k = k_s[h]
    s = jax.lax.dot_general(q, k, (((1,), (1,)), ((), ())),
                            preferred_element_type=jnp.float32)
    s = s * scale_inv
    s = s - jnp.max(s, axis=-1, keepdims=True)
    p = jnp.exp(s)
    p = p * pl.reciprocal(jnp.sum(p, axis=-1, keepdims=True), approx=True)
    # (attention dropout: identity in eval mode)
    att_s[h] = jnp.dot(p.astype(v_s.dtype), v_s[h],
                       preferred_element_type=jnp.float32).astype(att_s.dtype)

    @pl.when(h == pl.num_programs(1) - 1)
    def _():
        # Fused output projection over all heads + bias + residual.
        att = jnp.concatenate([att_s[hh] for hh in range(num_heads)], axis=-1)
        y = jnp.dot(att, wo_ref[...], preferred_element_type=jnp.float32)
        y = y + bo_ref[...] + x_ref[0].astype(jnp.float32)
        o_ref[0] = y.astype(o_ref.dtype)


def attention_block(x, pp):
    batch, seq, d = x.shape
    num_heads, head_dim = pp["num_heads"], pp["head_dim"]
    hd = num_heads * head_dim
    cdt = pp["wqkv"].dtype
    out_dtype = x.dtype

    flops = batch * (2 * seq * d * 3 * hd + 4 * seq * seq * hd + 2 * seq * hd * d)
    bytes_accessed = (
        2 * batch * seq * d * jnp.dtype(out_dtype).itemsize
        + int(pp["wqkv"].size + pp["wo"].size) * jnp.dtype(cdt).itemsize
        + 4 * (3 * hd + 3 * d))
    cost = pl.CostEstimate(flops=int(flops),
                           transcendentals=int(batch * num_heads * seq * (seq + 1)),
                           bytes_accessed=int(bytes_accessed))

    def _const(shape):  # constant-index operands: single-buffered (feedback #5)
        return pl.BlockSpec(shape, lambda b, h: (0,) * len(shape),
                            pipeline_mode=pl.Buffered(1))

    kernel = functools.partial(_attn_block_kernel, num_heads=num_heads,
                               head_dim=head_dim,
                               scale_inv=float(head_dim) ** -0.5, eps=_LN_EPS)

    return pl.pallas_call(
        kernel,
        out_shape=jax.ShapeDtypeStruct((batch, seq, d), out_dtype),
        grid_spec=pltpu.PrefetchScalarGridSpec(
            num_scalar_prefetch=0,
            grid=(batch, num_heads),
            in_specs=[
                pl.BlockSpec((1, seq, d), lambda b, h: (b, 0, 0)),   # x (f32 residual path)
                _const((1, d)),                                      # ln1 gamma
                _const((1, d)),                                      # ln1 beta
                _const((d, 3 * hd)),                                 # fused Wqkv
                _const((1, 3 * hd)),                                 # fused bqkv
                _const((hd, d)),                                     # Wo
                _const((1, d)),                                      # bo
            ],
            out_specs=pl.BlockSpec((1, seq, d), lambda b, h: (b, 0, 0)),
            scratch_shapes=[pltpu.VMEM((num_heads, seq, head_dim), cdt),   # Q staged
                            pltpu.VMEM((num_heads, seq, head_dim), cdt),   # K staged
                            pltpu.VMEM((num_heads, seq, head_dim), cdt),   # V staged
                            pltpu.VMEM((num_heads, seq, head_dim), cdt)],  # per-head out
        ),
        compiler_params=pltpu.CompilerParams(
            dimension_semantics=("parallel", "arbitrary"),
            vmem_limit_bytes=_vmem_limit_bytes()),
        cost_estimate=cost,
    )(x, pp["ln1_g"], pp["ln1_b"], pp["wqkv"], pp["bqkv"], pp["wo"], pp["bo"])


# ---------------------------------------------------------------------------
# Kernel 2: LN2 + fc1 + GELU + fc2 (hidden-tiled, f32 accumulator) + residual
# ---------------------------------------------------------------------------
def _mlp_block_kernel(y_ref, g2_ref, be2_ref, w1_ref, b1_ref, w2_ref, b2_ref,
                      o_ref, xn_ref, acc_ref, *, approx_gelu, eps):
    j = pl.program_id(1)

    @pl.when(j == 0)
    def _():
        y = y_ref[...].astype(jnp.float32)
        xn = _layernorm_f32(y, g2_ref[...], be2_ref[...], eps)
        xn_ref[...] = xn.astype(xn_ref.dtype)            # LN2 cache in compute dtype
        # Fold the fc2 bias into the accumulator init.
        acc_ref[...] = jnp.broadcast_to(b2_ref[...], acc_ref.shape)

    hmid = jnp.dot(xn_ref[...], w1_ref[...], preferred_element_type=jnp.float32)
    hmid = hmid + b1_ref[...]
    hmid = jax.nn.gelu(hmid, approximate=approx_gelu)     # f32 GELU (exact by default)
    # (dropout1: identity in eval mode)
    acc_ref[...] += jnp.dot(hmid.astype(w2_ref.dtype), w2_ref[...],
                            preferred_element_type=jnp.float32)

    @pl.when(j == pl.num_programs(1) - 1)
    def _():
        # (dropout2: identity in eval mode) ; add residual y and write out.
        o_ref[...] = (acc_ref[...] + y_ref[...].astype(jnp.float32)).astype(o_ref.dtype)


def _pick_hidden_tile(mlp_dim, d, tm, w_itemsize, vmem_budget):
    """Largest hidden tile whose working set fits the VMEM budget (multiples of 128)."""
    cands = [t for t in (mlp_dim, 4096, 2048, 1024, 512, 256, 128)
             if t <= mlp_dim and mlp_dim % t == 0]
    for tn in cands:
        need = (2 * 2 * d * tn * w_itemsize       # W1 + W2 slabs, double-buffered
                + tm * tn * 4                     # fc1/GELU f32 intermediate
                + tm * d * (4 + w_itemsize)       # f32 accumulator + LN2 cache
                + 3 * tm * d * 4)                 # y-in buffers + out block (approx)
        if need <= int(0.75 * vmem_budget):
            return tn
    return cands[-1]


def mlp_block(y, pp, *, approx_gelu=False, row_tile=None, hidden_tile=None):
    batch, seq, d = y.shape
    mlp_dim = pp["w1"].shape[1]
    cdt = pp["w1"].dtype
    out_dtype = y.dtype

    rows = batch * seq
    align = _row_align(cdt)
    tm = row_tile if row_tile is not None else min(1024, _round_up(rows, align))
    tm = max(align, _round_up(tm, align))
    rows_p = _round_up(rows, tm)                  # pad ragged row counts

    budget = _vmem_limit_bytes() or (64 * 1024 * 1024)
    tn = hidden_tile if hidden_tile is not None else _pick_hidden_tile(
        mlp_dim, d, tm, jnp.dtype(cdt).itemsize, budget)
    assert mlp_dim % tn == 0

    y2d = y.reshape(rows, d)                      # no wrapper cast: residual stays f32
    if rows_p != rows:
        y2d = jnp.pad(y2d, ((0, rows_p - rows), (0, 0)))

    flops = 4 * rows * d * mlp_dim
    bytes_accessed = (2 * rows_p * d * jnp.dtype(out_dtype).itemsize
                      + 2 * d * mlp_dim * jnp.dtype(cdt).itemsize)
    cost = pl.CostEstimate(flops=int(flops), transcendentals=int(rows * mlp_dim),
                           bytes_accessed=int(bytes_accessed))

    def _const(shape):
        return pl.BlockSpec(shape, lambda i, j: (0,) * len(shape),
                            pipeline_mode=pl.Buffered(1))

    kernel = functools.partial(_mlp_block_kernel, approx_gelu=approx_gelu, eps=_LN_EPS)
    grid = (rows_p // tm, mlp_dim // tn)

    out2d = pl.pallas_call(
        kernel,
        out_shape=jax.ShapeDtypeStruct((rows_p, d), out_dtype),
        grid_spec=pltpu.PrefetchScalarGridSpec(
            num_scalar_prefetch=0,
            grid=grid,
            in_specs=[
                pl.BlockSpec((tm, d), lambda i, j: (i, 0)),       # y rows (LN2 in + residual)
                _const((1, d)),                                   # ln2 gamma
                _const((1, d)),                                   # ln2 beta
                pl.BlockSpec((d, tn), lambda i, j: (0, j)),       # W1 slab (pipelined over j)
                pl.BlockSpec((1, tn), lambda i, j: (0, j)),       # b1 slab
                pl.BlockSpec((tn, d), lambda i, j: (j, 0)),       # W2 slab (pipelined over j)
                _const((1, d)),                                   # b2
            ],
            out_specs=pl.BlockSpec((tm, d), lambda i, j: (i, 0)),
            scratch_shapes=[pltpu.VMEM((tm, d), cdt),             # cached LN2(y) in MXU dtype
                            pltpu.VMEM((tm, d), jnp.float32)],    # fc2 accumulator
        ),
        compiler_params=pltpu.CompilerParams(
            dimension_semantics=("parallel", "arbitrary"),
            vmem_limit_bytes=_vmem_limit_bytes()),
        cost_estimate=cost,
    )(y2d, pp["ln2_g"], pp["ln2_b"], pp["w1"], pp["b1"], pp["w2"], pp["b2"])

    return out2d[:rows].reshape(batch, seq, d)


def encoder_block(x, packed_params, *, approx_gelu=False, row_tile=None,
                  hidden_tile=None):
    y = attention_block(x, packed_params)
    return mlp_block(y, packed_params, approx_gelu=approx_gelu,
                     row_tile=row_tile, hidden_tile=hidden_tile)


# ---------------------------------------------------------------------------
# Params + pure-JAX reference
# ---------------------------------------------------------------------------
def init_params(key, in_dim, mlp_dim, num_heads, dtype=jnp.float32):
    head_dim = in_dim // num_heads
    ks = jax.random.split(key, 16)
    s_in = 1.0 / (in_dim ** 0.5)
    s_mlp = 1.0 / (mlp_dim ** 0.5)
    u = lambda k, shape, s: jax.random.uniform(k, shape, dtype, -s, s)
    return dict(
        ln1_g=1.0 + 0.1 * jax.random.normal(ks[0], (in_dim,), dtype),
        ln1_b=0.1 * jax.random.normal(ks[1], (in_dim,), dtype),
        wq=u(ks[2], (in_dim, num_heads, head_dim), s_in),
        bq=u(ks[3], (num_heads, head_dim), 0.1),
        wk=u(ks[4], (in_dim, num_heads, head_dim), s_in),
        bk=u(ks[5], (num_heads, head_dim), 0.1),
        wv=u(ks[6], (in_dim, num_heads, head_dim), s_in),
        bv=u(ks[7], (num_heads, head_dim), 0.1),
        wo=u(ks[8], (num_heads, head_dim, in_dim), s_in),
        bo=u(ks[9], (in_dim,), 0.1),
        ln2_g=1.0 + 0.1 * jax.random.normal(ks[10], (in_dim,), dtype),
        ln2_b=0.1 * jax.random.normal(ks[11], (in_dim,), dtype),
        w1=u(ks[12], (in_dim, mlp_dim), s_in),
        b1=u(ks[13], (mlp_dim,), s_in),
        w2=u(ks[14], (mlp_dim, in_dim), s_mlp),
        b2=u(ks[15], (in_dim,), s_mlp),
    )


def encoder_ref(x, p, eps=_LN_EPS):
    hp = jax.lax.Precision.HIGHEST

    def ln(v, g, b):
        m = v.mean(-1, keepdims=True)
        var = ((v - m) ** 2).mean(-1, keepdims=True)
        return (v - m) / jnp.sqrt(var + eps) * g + b

    h = ln(x, p["ln1_g"], p["ln1_b"])
    q = jnp.einsum("bnd,dhe->bnhe", h, p["wq"], precision=hp) + p["bq"]
    k = jnp.einsum("bnd,dhe->bnhe", h, p["wk"], precision=hp) + p["bk"]
    v = jnp.einsum("bnd,dhe->bnhe", h, p["wv"], precision=hp) + p["bv"]
    s = jnp.einsum("bnhe,bmhe->bhnm", q, k, precision=hp) / (q.shape[-1] ** 0.5)
    a = jax.nn.softmax(s, axis=-1)
    o = jnp.einsum("bhnm,bmhe->bnhe", a, v, precision=hp)
    o = jnp.einsum("bnhe,hed->bnd", o, p["wo"], precision=hp) + p["bo"]
    y = o + x
    h2 = ln(y, p["ln2_g"], p["ln2_b"])
    h2 = jax.nn.gelu(jnp.einsum("bnd,dm->bnm", h2, p["w1"], precision=hp)
                     + p["b1"], approximate=False)
    out = jnp.einsum("bnm,md->bnd", h2, p["w2"], precision=hp) + p["b2"]
    return out + y


if __name__ == "__main__":
    batch, seq = 2, 8
    in_dim, mlp_dim, num_heads = 32, 64, 4

    key = jax.random.PRNGKey(0)
    kx, kp = jax.random.split(key)
    x = jax.random.normal(kx, (batch, seq, in_dim), jnp.float32)
    params = init_params(kp, in_dim, mlp_dim, num_heads)

    ref = encoder_ref(x, params)

    # f32 weights path.
    packed_f32 = pack_params(params)
    out = jax.block_until_ready(encoder_block(x, packed_f32))
    assert out.shape == (batch, seq, in_dim)
    assert jnp.allclose(out, ref, atol=2e-2, rtol=2e-2), "f32 mismatch vs reference"

    # bf16 MXU path: bf16 weights, f32 activations/residual, f32 accumulation.
    packed_bf16 = pack_params(params, compute_dtype=jnp.bfloat16)
    out_bf16 = jax.block_until_ready(encoder_block(x, packed_bf16))
    assert jnp.allclose(out_bf16, ref, atol=1e-1, rtol=1e-1), "bf16 mismatch vs reference"

    print("KERNEL_OK")
</pallas_src>

<mosaic_0001>
module attributes {stable_mosaic.version = 11 : i64} {
  func.func @_attn_block_kernel(%arg0: i32, %arg1: i32, %arg2: memref<1x8x32xf32, #tpu.memory_space<vmem>>, %arg3: memref<1x32xf32, #tpu.memory_space<vmem>>, %arg4: memref<1x32xf32, #tpu.memory_space<vmem>>, %arg5: memref<32x96xf32, #tpu.memory_space<vmem>>, %arg6: memref<1x96xf32, #tpu.memory_space<vmem>>, %arg7: memref<32x32xf32, #tpu.memory_space<vmem>>, %arg8: memref<1x32xf32, #tpu.memory_space<vmem>>, %arg9: memref<1x8x32xf32, #tpu.memory_space<vmem>>, %arg10: memref<4x8x8xf32, #tpu.memory_space<vmem>>, %arg11: memref<4x8x8xf32, #tpu.memory_space<vmem>>, %arg12: memref<4x8x8xf32, #tpu.memory_space<vmem>>, %arg13: memref<4x8x8xf32, #tpu.memory_space<vmem>>) attributes {dimension_semantics = [#tpu.dimension_semantics<parallel>, #tpu.dimension_semantics<arbitrary>], iteration_bounds = array<i64: 2, 4>, scalar_prefetch = 0 : i64, scratch_operands = 4 : i64, tpu.core_type = #tpu.core_type<tc>, window_params = [{transform_indices = @transform_0, window_bounds = array<i64: 1, 8, 32>}, {pipeline_mode = #tpu.pipeline_mode<synchronous>, transform_indices = @transform_1, window_bounds = array<i64: 1, 32>}, {pipeline_mode = #tpu.pipeline_mode<synchronous>, transform_indices = @transform_2, window_bounds = array<i64: 1, 32>}, {pipeline_mode = #tpu.pipeline_mode<synchronous>, transform_indices = @transform_3, window_bounds = array<i64: 32, 96>}, {pipeline_mode = #tpu.pipeline_mode<synchronous>, transform_indices = @transform_4, window_bounds = array<i64: 1, 96>}, {pipeline_mode = #tpu.pipeline_mode<synchronous>, transform_indices = @transform_5, window_bounds = array<i64: 32, 32>}, {pipeline_mode = #tpu.pipeline_mode<synchronous>, transform_indices = @transform_6, window_bounds = array<i64: 1, 32>}, {transform_indices = @transform_7, window_bounds = array<i64: 1, 8, 32>}]} {
    %c0_i32 = arith.constant 0 : i32
    %0 = arith.cmpi eq, %arg1, %c0_i32 : i32
    %1 = arith.extui %0 : i1 to i32
    %c0_i32_0 = arith.constant 0 : i32
    %2 = arith.cmpi ne, %1, %c0_i32_0 : i32
    scf.if %2 {
      %c0_13 = arith.constant 0 : index
      %c0_14 = arith.constant 0 : index
      %c0_15 = arith.constant 0 : index
      %33 = vector.load %arg2[%c0_13, %c0_14, %c0_15] : memref<1x8x32xf32, #tpu.memory_space<vmem>>, vector<1x8x32xf32>
      %34 = vector.shape_cast %33 : vector<1x8x32xf32> to vector<8x32xf32>
      %c0_16 = arith.constant 0 : index
      %c0_17 = arith.constant 0 : index
      %35 = vector.load %arg3[%c0_16, %c0_17] : memref<1x32xf32, #tpu.memory_space<vmem>>, vector<1x32xf32>
      %c0_18 = arith.constant 0 : index
      %c0_19 = arith.constant 0 : index
      %36 = vector.load %arg4[%c0_18, %c0_19] : memref<1x32xf32, #tpu.memory_space<vmem>>, vector<1x32xf32>
      %cst_20 = arith.constant dense<0.000000e+00> : vector<8xf32>
      %37 = vector.multi_reduction <add>, %34, %cst_20 [1] : vector<8x32xf32> to vector<8xf32>
      %38 = vector.shape_cast %37 : vector<8xf32> to vector<8x1xf32>
      %cst_21 = arith.constant 3.200000e+01 : f32
      %39 = vector.broadcast %cst_21 : f32 to vector<8x1xf32>
      %40 = arith.divf %38, %39 : vector<8x1xf32>
      %41 = vector.broadcast %40 : vector<8x1xf32> to vector<8x32xf32>
      %42 = arith.subf %34, %41 : vector<8x32xf32>
      %43 = arith.mulf %42, %42 : vector<8x32xf32>
      %cst_22 = arith.constant dense<0.000000e+00> : vector<8xf32>
      %44 = vector.multi_reduction <add>, %43, %cst_22 [1] : vector<8x32xf32> to vector<8xf32>
      %45 = vector.shape_cast %44 : vector<8xf32> to vector<8x1xf32>
      %cst_23 = arith.constant 3.200000e+01 : f32
      %46 = vector.broadcast %cst_23 : f32 to vector<8x1xf32>
      %47 = arith.divf %45, %46 : vector<8x1xf32>
      %cst_24 = arith.constant 9.99999974E-6 : f32
      %48 = vector.broadcast %cst_24 : f32 to vector<8x1xf32>
      %49 = arith.addf %47, %48 : vector<8x1xf32>
      %50 = math.rsqrt %49 : vector<8x1xf32>
      %51 = vector.broadcast %50 : vector<8x1xf32> to vector<8x32xf32>
      %52 = arith.mulf %42, %51 : vector<8x32xf32>
      %53 = vector.broadcast %35 : vector<1x32xf32> to vector<8x32xf32>
      %54 = arith.mulf %52, %53 : vector<8x32xf32>
      %55 = vector.broadcast %36 : vector<1x32xf32> to vector<8x32xf32>
      %56 = arith.addf %54, %55 : vector<8x32xf32>
      %c0_25 = arith.constant 0 : index
      %c0_26 = arith.constant 0 : index
      %57 = vector.load %arg5[%c0_25, %c0_26] : memref<32x96xf32, #tpu.memory_space<vmem>>, vector<32x96xf32>
      %cst_27 = arith.constant dense<0.000000e+00> : vector<8x96xf32>
      %58 = tpu.matmul %56, %57, %cst_27 {dimension_numbers = #tpu.dot_dimension_numbers<[1], [0], [0], [1], [0, 0, 1, 1], [], []>} : vector<8x32xf32>, vector<32x96xf32>, vector<8x96xf32> -> vector<8x96xf32>
      %c0_28 = arith.constant 0 : index
      %c0_29 = arith.constant 0 : index
      %59 = vector.load %arg6[%c0_28, %c0_29] : memref<1x96xf32, #tpu.memory_space<vmem>>, vector<1x96xf32>
      %60 = vector.broadcast %59 : vector<1x96xf32> to vector<8x96xf32>
      %61 = arith.addf %58, %60 : vector<8x96xf32>
      %62 = vector.extract_strided_slice %61 {offsets = [0, 0], sizes = [8, 8], strides = [1, 1]} : vector<8x96xf32> to vector<8x8xf32>
      %c0_30 = arith.constant 0 : index
      %c0_31 = arith.constant 0 : index
      %c0_32 = arith.constant 0 : index
      %63 = vector.load %arg10[%c0_30, %c0_31, %c0_32] : memref<4x8x8xf32, #tpu.memory_space<vmem>>, vector<1x8x8xf32>
      %64 = vector.shape_cast %63 : vector<1x8x8xf32> to vector<8x8xf32>
      %65 = vector.shape_cast %62 : vector<8x8xf32> to vector<1x8x8xf32>
      tpu.vector_store %arg10[%c0_30, %c0_31, %c0_32], %65 {strides = array<i32>} : memref<4x8x8xf32, #tpu.memory_space<vmem>>, vector<1x8x8xf32>,
      %66 = vector.extract_strided_slice %61 {offsets = [0, 32], sizes = [8, 8], strides = [1, 1]} : vector<8x96xf32> to vector<8x8xf32>
      %c0_33 = arith.constant 0 : index
      %c0_34 = arith.constant 0 : index
      %c0_35 = arith.constant 0 : index
      %67 = vector.load %arg11[%c0_33, %c0_34, %c0_35] : memref<4x8x8xf32, #tpu.memory_space<vmem>>, vector<1x8x8xf32>
      %68 = vector.shape_cast %67 : vector<1x8x8xf32> to vector<8x8xf32>
      %69 = vector.shape_cast %66 : vector<8x8xf32> to vector<1x8x8xf32>
      tpu.vector_store %arg11[%c0_33, %c0_34, %c0_35], %69 {strides = array<i32>} : memref<4x8x8xf32, #tpu.memory_space<vmem>>, vector<1x8x8xf32>,
      %70 = vector.extract_strided_slice %61 {offsets = [0, 64], sizes = [8, 8], strides = [1, 1]} : vector<8x96xf32> to vector<8x8xf32>
      %c0_36 = arith.constant 0 : index
      %c0_37 = arith.constant 0 : index
      %c0_38 = arith.constant 0 : index
      %71 = vector.load %arg12[%c0_36, %c0_37, %c0_38] : memref<4x8x8xf32, #tpu.memory_space<vmem>>, vector<1x8x8xf32>
      %72 = vector.shape_cast %71 : vector<1x8x8xf32> to vector<8x8xf32>
      %73 = vector.shape_cast %70 : vector<8x8xf32> to vector<1x8x8xf32>
      tpu.vector_store %arg12[%c0_36, %c0_37, %c0_38], %73 {strides = array<i32>} : memref<4x8x8xf32, #tpu.memory_space<vmem>>, vector<1x8x8xf32>,
      %74 = vector.extract_strided_slice %61 {offsets = [0, 8], sizes = [8, 8], strides = [1, 1]} : vector<8x96xf32> to vector<8x8xf32>
      %c1 = arith.constant 1 : index
      %c0_39 = arith.constant 0 : index
      %c0_40 = arith.constant 0 : index
      %75 = vector.load %arg10[%c1, %c0_39, %c0_40] : memref<4x8x8xf32, #tpu.memory_space<vmem>>, vector<1x8x8xf32>
      %76 = vector.shape_cast %75 : vector<1x8x8xf32> to vector<8x8xf32>
      %77 = vector.shape_cast %74 : vector<8x8xf32> to vector<1x8x8xf32>
      tpu.vector_store %arg10[%c1, %c0_39, %c0_40], %77 {strides = array<i32>} : memref<4x8x8xf32, #tpu.memory_space<vmem>>, vector<1x8x8xf32>,
      %78 = vector.extract_strided_slice %61 {offsets = [0, 40], sizes = [8, 8], strides = [1, 1]} : vector<8x96xf32> to vector<8x8xf32>
      %c1_41 = arith.constant 1 : index
      %c0_42 = arith.constant 0 : index
      %c0_43 = arith.constant 0 : index
      %79 = vector.load %arg11[%c1_41, %c0_42, %c0_43] : memref<4x8x8xf32, #tpu.memory_space<vmem>>, vector<1x8x8xf32>
      %80 = vector.shape_cast %79 : vector<1x8x8xf32> to vector<8x8xf32>
      %81 = vector.shape_cast %78 : vector<8x8xf32> to vector<1x8x8xf32>
      tpu.vector_store %arg11[%c1_41, %c0_42, %c0_43], %81 {strides = array<i32>} : memref<4x8x8xf32, #tpu.memory_space<vmem>>, vector<1x8x8xf32>,
      %82 = vector.extract_strided_slice %61 {offsets = [0, 72], sizes = [8, 8], strides = [1, 1]} : vector<8x96xf32> to vector<8x8xf32>
      %c1_44 = arith.constant 1 : index
      %c0_45 = arith.constant 0 : index
      %c0_46 = arith.constant 0 : index
      %83 = vector.load %arg12[%c1_44, %c0_45, %c0_46] : memref<4x8x8xf32, #tpu.memory_space<vmem>>, vector<1x8x8xf32>
      %84 = vector.shape_cast %83 : vector<1x8x8xf32> to vector<8x8xf32>
      %85 = vector.shape_cast %82 : vector<8x8xf32> to vector<1x8x8xf32>
      tpu.vector_store %arg12[%c1_44, %c0_45, %c0_46], %85 {strides = array<i32>} : memref<4x8x8xf32, #tpu.memory_space<vmem>>, vector<1x8x8xf32>,
      %86 = vector.extract_strided_slice %61 {offsets = [0, 16], sizes = [8, 8], strides = [1, 1]} : vector<8x96xf32> to vector<8x8xf32>
      %c2 = arith.constant 2 : index
      %c0_47 = arith.constant 0 : index
      %c0_48 = arith.constant 0 : index
      %87 = vector.load %arg10[%c2, %c0_47, %c0_48] : memref<4x8x8xf32, #tpu.memory_space<vmem>>, vector<1x8x8xf32>
      %88 = vector.shape_cast %87 : vector<1x8x8xf32> to vector<8x8xf32>
      %89 = vector.shape_cast %86 : vector<8x8xf32> to vector<1x8x8xf32>
      tpu.vector_store %arg10[%c2, %c0_47, %c0_48], %89 {strides = array<i32>} : memref<4x8x8xf32, #tpu.memory_space<vmem>>, vector<1x8x8xf32>,
      %90 = vector.extract_strided_slice %61 {offsets = [0, 48], sizes = [8, 8], strides = [1, 1]} : vector<8x96xf32> to vector<8x8xf32>
      %c2_49 = arith.constant 2 : index
      %c0_50 = arith.constant 0 : index
      %c0_51 = arith.constant 0 : index
      %91 = vector.load %arg11[%c2_49, %c0_50, %c0_51] : memref<4x8x8xf32, #tpu.memory_space<vmem>>, vector<1x8x8xf32>
      %92 = vector.shape_cast %91 : vector<1x8x8xf32> to vector<8x8xf32>
      %93 = vector.shape_cast %90 : vector<8x8xf32> to vector<1x8x8xf32>
      tpu.vector_store %arg11[%c2_49, %c0_50, %c0_51], %93 {strides = array<i32>} : memref<4x8x8xf32, #tpu.memory_space<vmem>>, vector<1x8x8xf32>,
      %94 = vector.extract_strided_slice %61 {offsets = [0, 80], sizes = [8, 8], strides = [1, 1]} : vector<8x96xf32> to vector<8x8xf32>
      %c2_52 = arith.constant 2 : index
      %c0_53 = arith.constant 0 : index
      %c0_54 = arith.constant 0 : index
      %95 = vector.load %arg12[%c2_52, %c0_53, %c0_54] : memref<4x8x8xf32, #tpu.memory_space<vmem>>, vector<1x8x8xf32>
      %96 = vector.shape_cast %95 : vector<1x8x8xf32> to vector<8x8xf32>
      %97 = vector.shape_cast %94 : vector<8x8xf32> to vector<1x8x8xf32>
      tpu.vector_store %arg12[%c2_52, %c0_53, %c0_54], %97 {strides = array<i32>} : memref<4x8x8xf32, #tpu.memory_space<vmem>>, vector<1x8x8xf32>,
      %98 = vector.extract_strided_slice %61 {offsets = [0, 24], sizes = [8, 8], strides = [1, 1]} : vector<8x96xf32> to vector<8x8xf32>
      %c3 = arith.constant 3 : index
      %c0_55 = arith.constant 0 : index
      %c0_56 = arith.constant 0 : index
      %99 = vector.load %arg10[%c3, %c0_55, %c0_56] : memref<4x8x8xf32, #tpu.memory_space<vmem>>, vector<1x8x8xf32>
      %100 = vector.shape_cast %99 : vector<1x8x8xf32> to vector<8x8xf32>
      %101 = vector.shape_cast %98 : vector<8x8xf32> to vector<1x8x8xf32>
      tpu.vector_store %arg10[%c3, %c0_55, %c0_56], %101 {strides = array<i32>} : memref<4x8x8xf32, #tpu.memory_space<vmem>>, vector<1x8x8xf32>,
      %102 = vector.extract_strided_slice %61 {offsets = [0, 56], sizes = [8, 8], strides = [1, 1]} : vector<8x96xf32> to vector<8x8xf32>
      %c3_57 = arith.constant 3 : index
      %c0_58 = arith.constant 0 : index
      %c0_59 = arith.constant 0 : index
      %103 = vector.load %arg11[%c3_57, %c0_58, %c0_59] : memref<4x8x8xf32, #tpu.memory_space<vmem>>, vector<1x8x8xf32>
      %104 = vector.shape_cast %103 : vector<1x8x8xf32> to vector<8x8xf32>
      %105 = vector.shape_cast %102 : vector<8x8xf32> to vector<1x8x8xf32>
      tpu.vector_store %arg11[%c3_57, %c0_58, %c0_59], %105 {strides = array<i32>} : memref<4x8x8xf32, #tpu.memory_space<vmem>>, vector<1x8x8xf32>,
      %106 = vector.extract_strided_slice %61 {offsets = [0, 88], sizes = [8, 8], strides = [1, 1]} : vector<8x96xf32> to vector<8x8xf32>
      %c3_60 = arith.constant 3 : index
      %c0_61 = arith.constant 0 : index
      %c0_62 = arith.constant 0 : index
      %107 = vector.load %arg12[%c3_60, %c0_61, %c0_62] : memref<4x8x8xf32, #tpu.memory_space<vmem>>, vector<1x8x8xf32>
      %108 = vector.shape_cast %107 : vector<1x8x8xf32> to vector<8x8xf32>
      %109 = vector.shape_cast %106 : vector<8x8xf32> to vector<1x8x8xf32>
      tpu.vector_store %arg12[%c3_60, %c0_61, %c0_62], %109 {strides = array<i32>} : memref<4x8x8xf32, #tpu.memory_space<vmem>>, vector<1x8x8xf32>,
    } else {
    }
    %3 = arith.index_cast %arg1 : i32 to index
    %c0 = arith.constant 0 : index
    %c0_1 = arith.constant 0 : index
    %4 = vector.load %arg10[%3, %c0, %c0_1] : memref<4x8x8xf32, #tpu.memory_space<vmem>>, vector<1x8x8xf32>
    %5 = vector.shape_cast %4 : vector<1x8x8xf32> to vector<8x8xf32>
    %6 = arith.index_cast %arg1 : i32 to index
    %c0_2 = arith.constant 0 : index
    %c0_3 = arith.constant 0 : index
    %7 = vector.load %arg11[%6, %c0_2, %c0_3] : memref<4x8x8xf32, #tpu.memory_space<vmem>>, vector<1x8x8xf32>
    %8 = vector.shape_cast %7 : vector<1x8x8xf32> to vector<8x8xf32>
    %cst = arith.constant dense<0.000000e+00> : vector<8x8xf32>
    %9 = tpu.matmul %5, %8, %cst {dimension_numbers = #tpu.dot_dimension_numbers<[1], [1], [0], [0], [0, 0, 1, 0], [], []>} : vector<8x8xf32>, vector<8x8xf32>, vector<8x8xf32> -> vector<8x8xf32>
    %cst_4 = arith.constant 0.353553385 : f32
    %10 = vector.broadcast %cst_4 : f32 to vector<8x8xf32>
    %11 = arith.mulf %9, %10 : vector<8x8xf32>
    %cst_5 = arith.constant dense<0xFF800000> : vector<8xf32>
    %12 = vector.multi_reduction <maximumf>, %11, %cst_5 [1] : vector<8x8xf32> to vector<8xf32>
    %13 = vector.shape_cast %12 : vector<8xf32> to vector<8x1xf32>
    %14 = vector.broadcast %13 : vector<8x1xf32> to vector<8x8xf32>
    %15 = arith.subf %11, %14 : vector<8x8xf32>
    %16 = math.exp %15 : vector<8x8xf32>
    %cst_6 = arith.constant dense<0.000000e+00> : vector<8xf32>
    %17 = vector.multi_reduction <add>, %16, %cst_6 [1] : vector<8x8xf32> to vector<8xf32>
    %18 = vector.shape_cast %17 : vector<8xf32> to vector<8x1xf32>
    %19 = tpu.reciprocal %18 {approx = true} : vector<8x1xf32> -> vector<8x1xf32>
    %20 = vector.broadcast %19 : vector<8x1xf32> to vector<8x8xf32>
    %21 = arith.mulf %16, %20 : vector<8x8xf32>
    %22 = arith.index_cast %arg1 : i32 to index
    %c0_7 = arith.constant 0 : index
    %c0_8 = arith.constant 0 : index
    %23 = vector.load %arg12[%22, %c0_7, %c0_8] : memref<4x8x8xf32, #tpu.memory_space<vmem>>, vector<1x8x8xf32>
    %24 = vector.shape_cast %23 : vector<1x8x8xf32> to vector<8x8xf32>
    %cst_9 = arith.constant dense<0.000000e+00> : vector<8x8xf32>
    %25 = tpu.matmul %21, %24, %cst_9 {dimension_numbers = #tpu.dot_dimension_numbers<[1], [0], [0], [1], [0, 0, 1, 1], [], []>} : vector<8x8xf32>, vector<8x8xf32>, vector<8x8xf32> -> vector<8x8xf32>
    %26 = arith.index_cast %arg1 : i32 to index
    %c0_10 = arith.constant 0 : index
    %c0_11 = arith.constant 0 : index
    %27 = vector.load %arg13[%26, %c0_10, %c0_11] : memref<4x8x8xf32, #tpu.memory_space<vmem>>, vector<1x8x8xf32>
    %28 = vector.shape_cast %27 : vector<1x8x8xf32> to vector<8x8xf32>
    %29 = vector.shape_cast %25 : vector<8x8xf32> to vector<1x8x8xf32>
    tpu.vector_store %arg13[%26, %c0_10, %c0_11], %29 {strides = array<i32>} : memref<4x8x8xf32, #tpu.memory_space<vmem>>, vector<1x8x8xf32>,
    %c3_i32 = arith.constant 3 : i32
    %30 = arith.cmpi eq, %arg1, %c3_i32 : i32
    %31 = arith.extui %30 : i1 to i32
    %c0_i32_12 = arith.constant 0 : i32
    %32 = arith.cmpi ne, %31, %c0_i32_12 : i32
    scf.if %32 {
      %c0_13 = arith.constant 0 : index
      %c0_14 = arith.constant 0 : index
      %c0_15 = arith.constant 0 : index
      %33 = vector.load %arg13[%c0_13, %c0_14, %c0_15] : memref<4x8x8xf32, #tpu.memory_space<vmem>>, vector<1x8x8xf32>
      %34 = vector.shape_cast %33 : vector<1x8x8xf32> to vector<8x8xf32>
      %c1 = arith.constant 1 : index
      %c0_16 = arith.constant 0 : index
      %c0_17 = arith.constant 0 : index
      %35 = vector.load %arg13[%c1, %c0_16, %c0_17] : memref<4x8x8xf32, #tpu.memory_space<vmem>>, vector<1x8x8xf32>
      %36 = vector.shape_cast %35 : vector<1x8x8xf32> to vector<8x8xf32>
      %c2 = arith.constant 2 : index
      %c0_18 = arith.constant 0 : index
      %c0_19 = arith.constant 0 : index
      %37 = vector.load %arg13[%c2, %c0_18, %c0_19] : memref<4x8x8xf32, #tpu.memory_space<vmem>>, vector<1x8x8xf32>
      %38 = vector.shape_cast %37 : vector<1x8x8xf32> to vector<8x8xf32>
      %c3 = arith.constant 3 : index
      %c0_20 = arith.constant 0 : index
      %c0_21 = arith.constant 0 : index
      %39 = vector.load %arg13[%c3, %c0_20, %c0_21] : memref<4x8x8xf32, #tpu.memory_space<vmem>>, vector<1x8x8xf32>
      %40 = vector.shape_cast %39 : vector<1x8x8xf32> to vector<8x8xf32>
      %41 = tpu.concatenate %34, %36, %38, %40 in 1 : vector<8x8xf32>, vector<8x8xf32>, vector<8x8xf32>, vector<8x8xf32> -> vector<8x32xf32>
      %c0_22 = arith.constant 0 : index
      %c0_23 = arith.constant 0 : index
      %42 = vector.load %arg7[%c0_22, %c0_23] : memref<32x32xf32, #tpu.memory_space<vmem>>, vector<32x32xf32>
      %cst_24 = arith.constant dense<0.000000e+00> : vector<8x32xf32>
      %43 = tpu.matmul %41, %42, %cst_24 {dimension_numbers = #tpu.dot_dimension_numbers<[1], [0], [0], [1], [0, 0, 1, 1], [], []>} : vector<8x32xf32>, vector<32x32xf32>, vector<8x32xf32> -> vector<8x32xf32>
      %c0_25 = arith.constant 0 : index
      %c0_26 = arith.constant 0 : index
      %44 = vector.load %arg8[%c0_25, %c0_26] : memref<1x32xf32, #tpu.memory_space<vmem>>, vector<1x32xf32>
      %45 = vector.broadcast %44 : vector<1x32xf32> to vector<8x32xf32>
      %46 = arith.addf %43, %45 : vector<8x32xf32>
      %c0_27 = arith.constant 0 : index
      %c0_28 = arith.constant 0 : index
      %c0_29 = arith.constant 0 : index
      %47 = vector.load %arg2[%c0_27, %c0_28, %c0_29] : memref<1x8x32xf32, #tpu.memory_space<vmem>>, vector<1x8x32xf32>
      %48 = vector.shape_cast %47 : vector<1x8x32xf32> to vector<8x32xf32>
      %49 = arith.addf %46, %48 : vector<8x32xf32>
      %c0_30 = arith.constant 0 : index
      %c0_31 = arith.constant 0 : index
      %c0_32 = arith.constant 0 : index
      %50 = vector.load %arg9[%c0_30, %c0_31, %c0_32] : memref<1x8x32xf32, #tpu.memory_space<vmem>>, vector<1x8x32xf32>
      %51 = vector.shape_cast %50 : vector<1x8x32xf32> to vector<8x32xf32>
      %52 = vector.shape_cast %49 : vector<8x32xf32> to vector<1x8x32xf32>
      tpu.vector_store %arg9[%c0_30, %c0_31, %c0_32], %52 {strides = array<i32>} : memref<1x8x32xf32, #tpu.memory_space<vmem>>, vector<1x8x32xf32>,
    } else {
    }
    return
  }
  func.func @transform_0(%arg0: i32, %arg1: i32) -> (i32, i32, i32) {
    %c0_i32 = arith.constant 0 : i32
    %c0_i32_0 = arith.constant 0 : i32
    %c0_i32_1 = arith.constant 0 : i32
    return %arg0, %c0_i32, %c0_i32_0 : i32, i32, i32
  }
  func.func @transform_1(%arg0: i32, %arg1: i32) -> (i32, i32) {
    %c0_i32 = arith.constant 0 : i32
    %c0_i32_0 = arith.constant 0 : i32
    %c0_i32_1 = arith.constant 0 : i32
    return %c0_i32, %c0_i32_0 : i32, i32
  }
  func.func @transform_2(%arg0: i32, %arg1: i32) -> (i32, i32) {
    %c0_i32 = arith.constant 0 : i32
    %c0_i32_0 = arith.constant 0 : i32
    %c0_i32_1 = arith.constant 0 : i32
    return %c0_i32, %c0_i32_0 : i32, i32
  }
  func.func @transform_3(%arg0: i32, %arg1: i32) -> (i32, i32) {
    %c0_i32 = arith.constant 0 : i32
    %c0_i32_0 = arith.constant 0 : i32
    %c0_i32_1 = arith.constant 0 : i32
    return %c0_i32, %c0_i32_0 : i32, i32
  }
  func.func @transform_4(%arg0: i32, %arg1: i32) -> (i32, i32) {
    %c0_i32 = arith.constant 0 : i32
    %c0_i32_0 = arith.constant 0 : i32
    %c0_i32_1 = arith.constant 0 : i32
    return %c0_i32, %c0_i32_0 : i32, i32
  }
  func.func @transform_5(%arg0: i32, %arg1: i32) -> (i32, i32) {
    %c0_i32 = arith.constant 0 : i32
    %c0_i32_0 = arith.constant 0 : i32
    %c0_i32_1 = arith.constant 0 : i32
    return %c0_i32, %c0_i32_0 : i32, i32
  }
  func.func @transform_6(%arg0: i32, %arg1: i32) -> (i32, i32) {
    %c0_i32 = arith.constant 0 : i32
    %c0_i32_0 = arith.constant 0 : i32
    %c0_i32_1 = arith.constant 0 : i32
    return %c0_i32, %c0_i32_0 : i32, i32
  }
  func.func @transform_7(%arg0: i32, %arg1: i32) -> (i32, i32, i32) {
    %c0_i32 = arith.constant 0 : i32
    %c0_i32_0 = arith.constant 0 : i32
    %c0_i32_1 = arith.constant 0 : i32
    return %arg0, %c0_i32, %c0_i32_0 : i32, i32, i32
  }
}

</mosaic_0001>

<llo_original>
// kernel: tpu_custom_call.1
$region0: #{tpu_custom_call.1}
  #allocation0 [shape = 'u32[]', space=smem, size = 0x4, offset = 0x4, fixed_abs, tag = 'smem constant byte address 0x4 - core index']
  #allocation1 [shape = 'u32[144,128]{1,0:T(1,128)}', space=vmem, size = 0x12000, scoped, tag = 'internal scratch']
  #allocation2 [shape = 'f32[4,8,8]{2,1,0:T(8,128)}', space=vmem, size = 0x4000, scoped, tag = 'scratch operand']
  #allocation3 [shape = 'f32[4,8,8]{2,1,0:T(8,128)}', space=vmem, size = 0x4000, scoped, tag = 'scratch operand']
  #allocation4 [shape = 'f32[4,8,8]{2,1,0:T(8,128)}', space=vmem, size = 0x4000, scoped, tag = 'scratch operand']
  #allocation5 [shape = 'f32[4,8,8]{2,1,0:T(8,128)}', space=vmem, size = 0x4000, scoped, tag = 'scratch operand']
  %s0 = inlined_call_operand.hbm [shape: f32[2,8,32], index: 0, kind: input, shape index: {}]
  %s1 = inlined_call_operand.vmem [shape: f32[1,32], index: 1, kind: input, shape index: {}]
  %s2 = inlined_call_operand.vmem [shape: f32[1,32], index: 2, kind: input, shape index: {}]
  %s3 = inlined_call_operand.hbm [shape: f32[32,96], index: 3, kind: input, shape index: {}]
  %s4 = inlined_call_operand.vmem [shape: f32[1,96], index: 4, kind: input, shape index: {}]
  %s5 = inlined_call_operand.hbm [shape: f32[32,32], index: 5, kind: input, shape index: {}]
  %s6 = inlined_call_operand.vmem [shape: f32[1,32], index: 6, kind: input, shape index: {}]
  %s7 = inlined_call_operand.hbm [shape: f32[2,8,32], index: 7, kind: output, shape index: {}]
  %s8 = sld [smem:[#allocation0]]
  $region81: #{tpu_custom_call.1} parent=0
    _
  %s10 = ssub.s32 1, %s8
  %s11 = scalar_select 0, %s10, %s8
  $region1: #{tpu_custom_call.1} parent=0
    #allocation6 [shape = 'u8[8192]{0}', space=vmem, size = 0x2000, scoped, tag = 'input window, operand 0']
    #allocation7 [shape = 's32[2]{0}', space=sflag, size = 0x8, scoped, tag = 'scoped memory for tpu_custom_call.1']
    #allocation8 [shape = 's32[2]{0}', space=sflag, size = 0x8, scoped, tag = 'scoped memory for tpu_custom_call.1']
    #allocation9 [shape = 'u8[16384]{0}', space=vmem, size = 0x4000, scoped, tag = 'input window, operand 3, single buffered']
    #allocation10 [shape = 's32[1]{0}', space=sflag, size = 0x4, scoped, tag = 'scoped memory for tpu_custom_call.1']
    #allocation11 [shape = 'u8[16384]{0}', space=vmem, size = 0x4000, scoped, tag = 'input window, operand 5, single buffered']
    #allocation12 [shape = 'u8[8192]{0}', space=vmem, size = 0x2000, scoped, tag = 'output window, operand 0']
    %12 = vsyncpa [#allocation7], 0
    %s13 = scalar_lea.sflag [#allocation7], 1
    %14 = vsyncpa %s13, 0
    %15 = vsyncpa [#allocation10], 0
    %16 = vsyncpa [#allocation8], 0
    %s17 = scalar_lea.sflag [#allocation8], 1
    %18 = vsyncpa %s17, 0
    loop: start=0, step=1, limit=10
    $region2: #{tpu_custom_call.1} parent=1 // loop_pre_header
      _
    $region3: #{tpu_custom_call.1} parent=1 // loop_header
      %s20 = sphi 0, %s24
      %p21 = scmp.ge.s32.totalorder %s20, 10
      %s27 = sphi 0, %s39
      %s28 = sphi 0, %s35
      %s29 = sphi 0, %s27
      %s30 = sphi 0, %s28
      %s31 = sphi 0, %s29
      %s32 = sphi 0, %s30
      %s42 = sphi 0, %s44
      %s45 = sphi 0, %s42
      %s46 = sphi 0, %s45
      %s62 = sphi 0, %s46
      %s66 = sphi 0, %s66
      %s68 = sphi 0, %s66
      %s69 = sphi 0, %s68
      %s83 = sphi 0, %s69
      %s87 = sphi 0, %s87
      %s89 = sphi 0, %s87
      %s90 = sphi 0, %s89
      %s104 = sphi 0, %s90
      %s108 = sphi 0, %s108
      %s110 = sphi 0, %s108
      %s111 = sphi 0, %s110
      %s125 = sphi 0, %s111
      %s129 = sphi 0, %s129
      %s131 = sphi 0, %s129
      %s132 = sphi 0, %s131
      %s146 = sphi 0, %s132
      %s150 = sphi 0, %s150
      %s152 = sphi 0, %s150
      %s153 = sphi 0, %s152
      %s167 = sphi 0, %s153
      %s171 = sphi 0, %s171
      %s173 = sphi 0, %s171
      %s174 = sphi 0, %s173
      %s188 = sphi 0, %s174
      %s194 = sphi 0, %s196
      %s197 = sphi 0, %s194
      %s198 = sphi 0, %s197
      %s214 = sphi 0, %s198
    $region4: #{tpu_custom_call.1} parent=1 // loop_header_branch
      %23 = sbr.rel (%p21) target = $region8
    $region5: #{tpu_custom_call.1} parent=1 // loop_body
      %s25 = ssub.s32 %s20, 1
      %s26 = ssub.s32 %s20, 2
      %s33 = sadd.s32 1, %s28
      %p34 = scmp.ge.s32.totalorder %s33, 4
      %s35 = scalar_select %p34, 0, %s33
      %s36 = sadd.s32 1, %s27
      %s37 = scalar_select %p34, %s36, %s27
      %p38 = scmp.ge.s32.totalorder %s37, 2
      %s39 = scalar_select %p38, 0, %s37
      %s40 = ssub.s32 %s27, %s39
      %p41 = scmp.eq.s32.totalorder %s40, 0
      %s43 = sadd.s32 %s42, 1
      %s44 = scalar_select %p41, %s42, %s43
      %p47 = pneg %p41
      %p48 = scmp.eq.s32.totalorder %s20, 7
      %p49 = por %p47, %p48
      %p50 = scmp.ne.s32.totalorder %s42, %s45
      %p51 = scmp.eq.s32.totalorder %s20, 0
      %p52 = por %p50, %p51
      %p53 = scmp.ne.s32.totalorder %s42, %s45
      %p54 = scmp.eq.s32.totalorder %s25, 7
      %p55 = por %p53, %p54
      %p56 = scmp.ne.s32.totalorder %s45, %s46
      %p57 = scmp.eq.s32.totalorder %s25, 0
      %p58 = por %p56, %p57
      %p59 = scmp.ne.s32.totalorder %s45, %s46
      %p60 = scmp.eq.s32.totalorder %s26, 7
      %p61 = por %p59, %p60
      %p63 = scmp.ne.s32.totalorder %s46, %s62
      %p64 = scmp.eq.s32.totalorder %s26, 0
      %p65 = por %p63, %p64
      %s67 = sadd.s32 %s66, 1
      %p70 = scmp.eq.s32.totalorder %s20, 7
      %p71 = scmp.ne.s32.totalorder %s66, %s68
      %p72 = scmp.eq.s32.totalorder %s20, 0
      %p73 = por %p71, %p72
      %p74 = scmp.ne.s32.totalorder %s66, %s68
      %p75 = scmp.eq.s32.totalorder %s25, 7
      %p76 = por %p74, %p75
      %p77 = scmp.ne.s32.totalorder %s68, %s69
      %p78 = scmp.eq.s32.totalorder %s25, 0
      %p79 = por %p77, %p78
      %p80 = scmp.ne.s32.totalorder %s68, %s69
      %p81 = scmp.eq.s32.totalorder %s26, 7
      %p82 = por %p80, %p81
      %p84 = scmp.ne.s32.totalorder %s69, %s83
      %p85 = scmp.eq.s32.totalorder %s26, 0
      %p86 = por %p84, %p85
      %s88 = sadd.s32 %s87, 1
      %p91 = scmp.eq.s32.totalorder %s20, 7
      %p92 = scmp.ne.s32.totalorder %s87, %s89
      %p93 = scmp.eq.s32.totalorder %s20, 0
      %p94 = por %p92, %p93
      %p95 = scmp.ne.s32.totalorder %s87, %s89
      %p96 = scmp.eq.s32.totalorder %s25, 7
      %p97 = por %p95, %p96
      %p98 = scmp.ne.s32.totalorder %s89, %s90
      %p99 = scmp.eq.s32.totalorder %s25, 0
      %p100 = por %p98, %p99
      %p101 = scmp.ne.s32.totalorder %s89, %s90
      %p102 = scmp.eq.s32.totalorder %s26, 7
      %p103 = por %p101, %p102
      %p105 = scmp.ne.s32.totalorder %s90, %s104
      %p106 = scmp.eq.s32.totalorder %s26, 0
      %p107 = por %p105, %p106
      %s109 = sadd.s32 %s108, 1
      %p112 = scmp.eq.s32.totalorder %s20, 7
      %p113 = scmp.ne.s32.totalorder %s108, %s110
      %p114 = scmp.eq.s32.totalorder %s20, 0
      %p115 = por %p113, %p114
      %p116 = scmp.ne.s32.totalorder %s108, %s110
      %p117 = scmp.eq.s32.totalorder %s25, 7
      %p118 = por %p116, %p117
      %p119 = scmp.ne.s32.totalorder %s110, %s111
      %p120 = scmp.eq.s32.totalorder %s25, 0
      %p121 = por %p119, %p120
      %p122 = scmp.ne.s32.totalorder %s110, %s111
      %p123 = scmp.eq.s32.totalorder %s26, 7
      %p124 = por %p122, %p123
      %p126 = scmp.ne.s32.totalorder %s111, %s125
      %p127 = scmp.eq.s32.totalorder %s26, 0
      %p128 = por %p126, %p127
      %s130 = sadd.s32 %s129, 1
      %p133 = scmp.eq.s32.totalorder %s20, 7
      %p134 = scmp.ne.s32.totalorder %s129, %s131
      %p135 = scmp.eq.s32.totalorder %s20, 0
      %p136 = por %p134, %p135
      %p137 = scmp.ne.s32.totalorder %s129, %s131
      %p138 = scmp.eq.s32.totalorder %s25, 7
      %p139 = por %p137, %p138
      %p140 = scmp.ne.s32.totalorder %s131, %s132
      %p141 = scmp.eq.s32.totalorder %s25, 0
      %p142 = por %p140, %p141
      %p143 = scmp.ne.s32.totalorder %s131, %s132
      %p144 = scmp.eq.s32.totalorder %s26, 7
      %p145 = por %p143, %p144
      %p147 = scmp.ne.s32.totalorder %s132, %s146
      %p148 = scmp.eq.s32.totalorder %s26, 0
      %p149 = por %p147, %p148
      %s151 = sadd.s32 %s150, 1
      %p154 = scmp.eq.s32.totalorder %s20, 7
      %p155 = scmp.ne.s32.totalorder %s150, %s152
      %p156 = scmp.eq.s32.totalorder %s20, 0
      %p157 = por %p155, %p156
      %p158 = scmp.ne.s32.totalorder %s150, %s152
      %p159 = scmp.eq.s32.totalorder %s25, 7
      %p160 = por %p158, %p159
      %p161 = scmp.ne.s32.totalorder %s152, %s153
      %p162 = scmp.eq.s32.totalorder %s25, 0
      %p163 = por %p161, %p162
      %p164 = scmp.ne.s32.totalorder %s152, %s153
      %p165 = scmp.eq.s32.totalorder %s26, 7
      %p166 = por %p164, %p165
      %p168 = scmp.ne.s32.totalorder %s153, %s167
      %p169 = scmp.eq.s32.totalorder %s26, 0
      %p170 = por %p168, %p169
      %s172 = sadd.s32 %s171, 1
      %p175 = scmp.eq.s32.totalorder %s20, 7
      %p176 = scmp.ne.s32.totalorder %s171, %s173
      %p177 = scmp.eq.s32.totalorder %s20, 0
      %p178 = por %p176, %p177
      %p179 = scmp.ne.s32.totalorder %s171, %s173
      %p180 = scmp.eq.s32.totalorder %s25, 7
      %p181 = por %p179, %p180
      %p182 = scmp.ne.s32.totalorder %s173, %s174
      %p183 = scmp.eq.s32.totalorder %s25, 0
      %p184 = por %p182, %p183
      %p185 = scmp.ne.s32.totalorder %s173, %s174
      %p186 = scmp.eq.s32.totalorder %s26, 7
      %p187 = por %p185, %p186
      %p189 = scmp.ne.s32.totalorder %s174, %s188
      %p190 = scmp.eq.s32.totalorder %s26, 0
      %p191 = por %p189, %p190
      %s192 = ssub.s32 %s27, %s39
      %p193 = scmp.eq.s32.totalorder %s192, 0
      %s195 = sadd.s32 %s194, 1
      %s196 = scalar_select %p193, %s194, %s195
      %p199 = pneg %p193
      %p200 = scmp.eq.s32.totalorder %s20, 7
      %p201 = por %p199, %p200
      %p202 = scmp.ne.s32.totalorder %s194, %s197
      %p203 = scmp.eq.s32.totalorder %s20, 0
      %p204 = por %p202, %p203
      %p205 = scmp.ne.s32.totalorder %s194, %s197
      %p206 = scmp.eq.s32.totalorder %s25, 7
      %p207 = por %p205, %p206
      %p208 = scmp.ne.s32.totalorder %s197, %s198
      %p209 = scmp.eq.s32.totalorder %s25, 0
      %p210 = por %p208, %p209
      %p211 = scmp.ne.s32.totalorder %s197, %s198
      %p212 = scmp.eq.s32.totalorder %s26, 7
      %p213 = por %p211, %p212
      %p215 = scmp.ne.s32.totalorder %s198, %s214
      %p216 = scmp.eq.s32.totalorder %s26, 0
      %p217 = por %p215, %p216
      %p218 = scmp.le.s32.totalorder 1, %s20
      %p219 = scmp.lt.s32.totalorder %s20, 9
      %p220 = pnand %p218, %p219
      %p221 = pneg %p220
      // Predicated region
      $region9: #{tpu_custom_call.1} parent=5 // pred_check
        _
      $region10: #{tpu_custom_call.1} parent=5 // pred_check_branch
        %223 = sbr.rel (%p220) target = $region12
      $region11: #{tpu_custom_call.1} parent=5 // pred_region
        %s224 = ssub.s32 %s20, 1
        // Predicated region
        $region13: #{tpu_custom_call.1} parent=11 // pred_check
          %p225 = pneg %p79
        $region14: #{tpu_custom_call.1} parent=11 // pred_check_branch
          %227 = sbr.rel (%p225) target = $region16
        $region15: #{tpu_custom_call.1} parent=11 // pred_region
          _
        $region16: #{tpu_custom_call.1} parent=11 // pred_fallthru
          _
        // Predicated region
        $region17: #{tpu_custom_call.1} parent=11 // pred_check
          %p228 = pneg %p100
        $region18: #{tpu_custom_call.1} parent=11 // pred_check_branch
          %230 = sbr.rel (%p228) target = $region20
        $region19: #{tpu_custom_call.1} parent=11 // pred_region
          _
        $region20: #{tpu_custom_call.1} parent=11 // pred_fallthru
          _
        // Predicated region
        $region21: #{tpu_custom_call.1} parent=11 // pred_check
          %p231 = pneg %p121
        $region22: #{tpu_custom_call.1} parent=11 // pred_check_branch
          %233 = sbr.rel (%p231) target = $region24
        $region23: #{tpu_custom_call.1} parent=11 // pred_region
          %s235 = ssub.s32 512, 512
          %236 = vsyncadd [#allocation10], %s235
          %s237 = sshll.u32 [#allocation9], 4
          %s238 = int_to_ptr.vmem [resolvable:$true] %s237
          %243 = dma.hbm_to_vmem [thread:$0]  %s3, 512, %s238, [#allocation10], 128, 128, 8
        $region24: #{tpu_custom_call.1} parent=11 // pred_fallthru
          _
        // Predicated region
        $region25: #{tpu_custom_call.1} parent=11 // pred_check
          %p244 = pneg %p142
        $region26: #{tpu_custom_call.1} parent=11 // pred_check_branch
          %246 = sbr.rel (%p244) target = $region28
        $region27: #{tpu_custom_call.1} parent=11 // pred_region
          _
        $region28: #{tpu_custom_call.1} parent=11 // pred_fallthru
          _
        // Predicated region
        $region29: #{tpu_custom_call.1} parent=11 // pred_check
          %p247 = pneg %p163
        $region30: #{tpu_custom_call.1} parent=11 // pred_check_branch
          %249 = sbr.rel (%p247) target = $region32
        $region31: #{tpu_custom_call.1} parent=11 // pred_region
          %s251 = ssub.s32 512, 512
          %252 = vsyncadd [#allocation10], %s251
          %s253 = sshll.u32 [#allocation11], 4
          %s254 = int_to_ptr.vmem [resolvable:$true] %s253
          %259 = dma.hbm_to_vmem [thread:$0]  %s5, 512, %s254, [#allocation10], 128, 128, 8
        $region32: #{tpu_custom_call.1} parent=11 // pred_fallthru
          _
        // Predicated region
        $region33: #{tpu_custom_call.1} parent=11 // pred_check
          %p260 = pneg %p184
        $region34: #{tpu_custom_call.1} parent=11 // pred_check_branch
          %262 = sbr.rel (%p260) target = $region36
        $region35: #{tpu_custom_call.1} parent=11 // pred_region
          _
        $region36: #{tpu_custom_call.1} parent=11 // pred_fallthru
          _
      $region12: #{tpu_custom_call.1} parent=5 // pred_fallthru
        _
      %p263 = scmp.lt.s32.totalorder %s20, 8
      // Predicated region
      $region37: #{tpu_custom_call.1} parent=5 // pred_check
        %p264 = pneg %p263
      $region38: #{tpu_custom_call.1} parent=5 // pred_check_branch
        %266 = sbr.rel (%p264) target = $region40
      $region39: #{tpu_custom_call.1} parent=5 // pred_region
        // Predicated region
        $region41: #{tpu_custom_call.1} parent=39 // pred_check
          %p267 = pneg %p52
        $region42: #{tpu_custom_call.1} parent=39 // pred_check_branch
          %269 = sbr.rel (%p267) target = $region44
        $region43: #{tpu_custom_call.1} parent=39 // pred_region
          %s270 = sand.u32 %s42, 1
          %s271 = scalar_lea.sflag [#allocation7], %s270
          %s272 = sand.u32 %s42, 1
          %s273 = smul.addr %s272, 8
          %s274 = scalar_lea.vmem [#allocation6], %s273
          %s276 = ssub.s32 128, 128
          %277 = vsyncadd %s271, %s276
          %s278 = smul.addr %s27, 128
          %s279 = scalar_lea.hbm %s0, %s278
          %s281 = sshll.u32 %s274, 4
          %s282 = int_to_ptr.vmem [resolvable:$true] %s281
          %284 = dma.hbm_to_vmem [thread:$0]  %s279, 128, %s282, %s271
        $region44: #{tpu_custom_call.1} parent=39 // pred_fallthru
          _
      $region40: #{tpu_custom_call.1} parent=5 // pred_fallthru
        _
      %p285 = scmp.le.s32.totalorder 1, %s20
      %p286 = scmp.lt.s32.totalorder %s20, 9
      %p287 = pnand %p285, %p286
      %p288 = pneg %p287
      // Predicated region
      $region45: #{tpu_custom_call.1} parent=5 // pred_check
        _
      $region46: #{tpu_custom_call.1} parent=5 // pred_check_branch
        %290 = sbr.rel (%p287) target = $region48
      $region47: #{tpu_custom_call.1} parent=5 // pred_region
        %s291 = ssub.s32 %s20, 1
        %s292 = sand.u32 %s45, 1
        %s293 = scalar_lea.sflag [#allocation7], %s292
        %s294 = sand.u32 %s45, 1
        %s295 = smul.addr %s294, 8
        %s296 = scalar_lea.vmem [#allocation6], %s295
        // Predicated region
        $region49: #{tpu_custom_call.1} parent=47 // pred_check
          %p297 = pneg %p58
        $region50: #{tpu_custom_call.1} parent=47 // pred_check_branch
          %299 = sbr.rel (%p297) target = $region52
        $region51: #{tpu_custom_call.1} parent=47 // pred_region
          %300 = dma.done %s293, 128
        $region52: #{tpu_custom_call.1} parent=47 // pred_fallthru
          _
        // Predicated region
        $region53: #{tpu_custom_call.1} parent=47 // pred_check
          %p301 = pneg %p121
        $region54: #{tpu_custom_call.1} parent=47 // pred_check_branch
          %303 = sbr.rel (%p301) target = $region56
        $region55: #{tpu_custom_call.1} parent=47 // pred_region
          %304 = dma.done [#allocation10], 512
        $region56: #{tpu_custom_call.1} parent=47 // pred_fallthru
          _
        // Predicated region
        $region57: #{tpu_custom_call.1} parent=47 // pred_check
          %p305 = pneg %p163
        $region58: #{tpu_custom_call.1} parent=47 // pred_check_branch
          %307 = sbr.rel (%p305) target = $region60
        $region59: #{tpu_custom_call.1} parent=47 // pred_region
          %308 = dma.done [#allocation10], 512
        $region60: #{tpu_custom_call.1} parent=47 // pred_fallthru
          _
        %s309 = sand.u32 %s45, 1
        %s310 = scalar_lea.sflag [#allocation7], %s309
        %s311 = sand.u32 %s45, 1
        %s312 = smul.addr %s311, 8
        %s313 = scalar_lea.vmem [#allocation6], %s312
        %p314 = pneg %p58
        %p315 = pneg %p55
        %p316 = pneg %p79
        %p317 = pneg %p76
        %p318 = pneg %p100
        %p319 = pneg %p97
        %p320 = pneg %p121
        %p321 = pneg %p118
        %p322 = pneg %p142
        %p323 = pneg %p139
        %p324 = pneg %p163
        %p325 = pneg %p160
        %p326 = pneg %p184
        %p327 = pneg %p181
        %p328 = pneg %p210
        %p329 = pneg %p207
        %s330 = sand.u32 %s197, 1
        %s331 = scalar_lea.sflag [#allocation8], %s330
        %s332 = sand.u32 %s197, 1
        %s333 = smul.addr %s332, 8
        %s334 = scalar_lea.vmem [#allocation12], %s333
        %p335 = scmp.eq.s32.totalorder %s30, 0
        // Predicated region
        $region61: #{tpu_custom_call.1} parent=47 // pred_check
          %p336 = pneg %p335
        $region62: #{tpu_custom_call.1} parent=47 // pred_check_branch
          %338 = sbr.rel (%p336) target = $region64
        $region63: #{tpu_custom_call.1} parent=47 // pred_region
          %v339 = vld [vmem:[%s296] sm:$0xff]
          %v340 = vld [vmem:[%s1] sm:$0x1]
          %v341 = vld [vmem:[%s2] sm:$0x1]
          %vm342 = vcmask 261120
          %v343 = vsel %vm342, %v339, 0.0
          %344 = vadd.xlane.f32.xlu0 %v343
          %v345 = vpop.xlane.xlu0 %344
          %v346 = vrcp.pop 32.0
          %v347 = vmul.f32 %v345, %v346
          %v348 = vsub.f32 %v339, %v347
          %v349 = vmul.f32 %v348, %v348
          %v350 = vsel %vm342, %v349, 0.0
          %351 = vadd.xlane.f32.xlu0 %v350
          %v352 = vpop.xlane.xlu0 %351
          %v353 = vmul.f32 %v352, %v346
          %v354 = vadd.f32 %v353, 1e-05
          %v355 = vrsqrt.pop %v354
          %v356 = vmul.f32 %v348, %v355
          %v358 = vlaneseq
          %v359 = vshrl.u32 %v358, 7
          %v360 = vsub.s32 0, %v359
          %v361 = vrot.slane %v340, %v360
          %v363 = vmul.f32 %v356, %v361
          %v365 = vlaneseq
          %v366 = vshrl.u32 %v365, 7
          %v367 = vsub.s32 0, %v366
          %v368 = vrot.slane %v341, %v367
          %v370 = vadd.f32 %v363, %v368
          %v371 = vld [vmem:[#allocation9] sm:$0xff]
          %v372 = vld [vmem:[#allocation9 + $0x8] sm:$0xff]
          %v373 = vld [vmem:[#allocation9 + $0x10] sm:$0xff]
          %v374 = vld [vmem:[#allocation9 + $0x18] sm:$0xff]
          %v375 = vld [vmem:[%s4] sm:$0x1]
          %v377 = vlaneseq
          %v378 = vshrl.u32 %v377, 7
          %v379 = vsub.s32 0, %v378
          %v380 = vrot.slane %v375, %v379
          %v383 = vsel %vm342, %v370, 0
          %385 = vmatprep.subr.mxu0 0.0
          %386 = vmatpush1.msra.mxu0 0.0
          %387 = vmatprep.subr.mxu0 0.0
          %388 = vmatpush1.msra.mxu0 0.0
          %389 = vmatprep.subr.mxu0 0.0
          %390 = vmatpush1.msra.mxu0 0.0
          %391 = vmatprep.subr.mxu0 0.0
          %392 = vmatpush1.msra.mxu0 0.0
          %393 = vmatprep.subr.mxu0 0.0
          %394 = vmatpush1.msra.mxu0 0.0
          %395 = vmatprep.subr.mxu0 0.0
          %396 = vmatpush1.msra.mxu0 0.0
          %397 = vmatprep.subr.mxu0 0.0
          %398 = vmatpush1.msra.mxu0 0.0
          %399 = vmatprep.subr.mxu0 0.0
          %400 = vmatpush1.msra.mxu0 0.0
          %401 = vmatprep.subr.mxu0 0.0
          %402 = vmatpush1.msra.mxu0 0.0
          %403 = vmatprep.subr.mxu0 0.0
          %404 = vmatpush1.msra.mxu0 0.0
          %405 = vmatprep.subr.mxu0 0.0
          %406 = vmatpush1.msra.mxu0 0.0
          %407 = vmatprep.subr.mxu0 0.0
          %408 = vmatpush1.msra.mxu0 0.0
          %409 = vmatprep.subr.mxu0 0.0
          %410 = vmatpush1.msra.mxu0 %v374
          %411 = vmatprep.subr.mxu0 0.0
          %412 = vmatpush1.msra.mxu0 %v373
          %413 = vmatprep.subr.mxu0 0.0
          %414 = vmatpush1.msra.mxu0 %v372
          %415 = vmatprep.subr.mxu0 0.0
          %416 = vmatpush1.msra.mxu0 %v371
          %417 = vmatprep.subr.mxu0 0.0
          %418 = vmatpush2.msra.mxu0 0.0
          %419 = vmatprep.subr.mxu0 0.0
          %420 = vmatpush2.msra.mxu0 0.0
          %421 = vmatprep.subr.mxu0 0.0
          %422 = vmatpush2.msra.mxu0 0.0
          %423 = vmatprep.subr.mxu0 0.0
          %424 = vmatpush2.msra.mxu0 0.0
          %425 = vmatprep.subr.mxu0 0.0
          %426 = vmatpush2.msra.mxu0 0.0
          %427 = vmatprep.subr.mxu0 0.0
          %428 = vmatpush2.msra.mxu0 0.0
          %429 = vmatprep.subr.mxu0 0.0
          %430 = vmatpush2.msra.mxu0 0.0
          %431 = vmatprep.subr.mxu0 0.0
          %432 = vmatpush2.msra.mxu0 0.0
          %433 = vmatprep.subr.mxu0 0.0
          %434 = vmatpush2.msra.mxu0 0.0
          %435 = vmatprep.subr.mxu0 0.0
          %436 = vmatpush2.msra.mxu0 0.0
          %437 = vmatprep.subr.mxu0 0.0
          %438 = vmatpush2.msra.mxu0 0.0
          %439 = vmatprep.subr.mxu0 0.0
          %440 = vmatpush2.msra.mxu0 0.0
          %441 = vmatprep.subr.mxu0 0.0
          %442 = vmatpush2.msra.mxu0 0.0
          %443 = vmatprep.subr.mxu0 0.0
          %444 = vmatpush2.msra.mxu0 0.0
          %445 = vmatprep.subr.mxu0 0.0
          %446 = vmatpush2.msra.mxu0 0.0
          %447 = vmatprep.subr.mxu0 0.0
          %448 = vmatpush2.msra.mxu0 0.0
          %449 = vmatprep.mubr.f32.mxu0 0.0
          %450 = vmatmul.mubr.f32.gmra.mxu0 %v383
          %v451 = vpop.f32.mrf.mxu0
          %v452 = vadd.f32 %v380, %v451
          %v453 = vpop.f32.mrf.mxu0
          %454 = vdwg.mxu0
          %vm455 = vcmask 64512
          %456 = vst.msk [vmem:[#allocation2] sm:$0xff] %vm455, %v452
          %458 = vrot.lane.b32.xlu0 %v452, 96
          %v459 = vpop.permute.xlu0 %458
          %461 = vst.msk [vmem:[#allocation3] sm:$0xff] %vm455, %v459
          %462 = vrot.lane.b32.xlu0 %v452, 64
          %v463 = vpop.permute.xlu0 %462
          %465 = vst.msk [vmem:[#allocation4] sm:$0xff] %vm455, %v463
          %466 = vrot.lane.b32.xlu0 %v452, 120
          %v467 = vpop.permute.xlu0 %466
          %s469 = scalar_lea.vmem [#allocation2], 8
          %470 = vst.msk [vmem:[%s469] sm:$0xff] %vm455, %v467
          %471 = vrot.lane.b32.xlu0 %v452, 88
          %v472 = vpop.permute.xlu0 %471
          %s474 = scalar_lea.vmem [#allocation3], 8
          %475 = vst.msk [vmem:[%s474] sm:$0xff] %vm455, %v472
          %476 = vrot.lane.b32.xlu0 %v452, 56
          %v477 = vpop.permute.xlu0 %476
          %s479 = scalar_lea.vmem [#allocation4], 8
          %480 = vst.msk [vmem:[%s479] sm:$0xff] %vm455, %v477
          %481 = vrot.lane.b32.xlu0 %v452, 112
          %v482 = vpop.permute.xlu0 %481
          %s484 = scalar_lea.vmem [#allocation2], 16
          %485 = vst.msk [vmem:[%s484] sm:$0xff] %vm455, %v482
          %486 = vrot.lane.b32.xlu0 %v452, 80
          %v487 = vpop.permute.xlu0 %486
          %s489 = scalar_lea.vmem [#allocation3], 16
          %490 = vst.msk [vmem:[%s489] sm:$0xff] %vm455, %v487
          %491 = vrot.lane.b32.xlu0 %v452, 48
          %v492 = vpop.permute.xlu0 %491
          %s494 = scalar_lea.vmem [#allocation4], 16
          %495 = vst.msk [vmem:[%s494] sm:$0xff] %vm455, %v492
          %496 = vrot.lane.b32.xlu0 %v452, 104
          %v497 = vpop.permute.xlu0 %496
          %s499 = scalar_lea.vmem [#allocation2], 24
          %500 = vst.msk [vmem:[%s499] sm:$0xff] %vm455, %v497
          %501 = vrot.lane.b32.xlu0 %v452, 72
          %v502 = vpop.permute.xlu0 %501
          %s504 = scalar_lea.vmem [#allocation3], 24
          %505 = vst.msk [vmem:[%s504] sm:$0xff] %vm455, %v502
          %506 = vrot.lane.b32.xlu0 %v452, 40
          %v507 = vpop.permute.xlu0 %506
          %s509 = scalar_lea.vmem [#allocation4], 24
          %510 = vst.msk [vmem:[%s509] sm:$0xff] %vm455, %v507
        $region64: #{tpu_custom_call.1} parent=47 // pred_fallthru
          _
        %s511 = smul.u32 %s30, 8
        %s512 = scalar_lea.vmem [#allocation2], %s511
        %v513 = vld [vmem:[%s512] sm:$0xff]
        %s514 = scalar_lea.vmem [#allocation3], %s511
        %v515 = vld [vmem:[%s514] sm:$0xff]
        %vm516 = vcmask 64512
        %v518 = vsel %vm516, %v513, 0
        %v521 = vsel %vm516, %v515, 0
        %523 = vmatprep.subr.mxu0 0.0
        %524 = vmatpush1.xpose.msra.mxu0 0.0
        %525 = vmatprep.subr.mxu0 0.0
        %526 = vmatpush1.xpose.msra.mxu0 0.0
        %527 = vmatprep.subr.mxu0 0.0
        %528 = vmatpush1.xpose.msra.mxu0 0.0
        %529 = vmatprep.subr.mxu0 0.0
        %530 = vmatpush1.xpose.msra.mxu0 0.0
        %531 = vmatprep.subr.mxu0 0.0
        %532 = vmatpush1.xpose.msra.mxu0 0.0
        %533 = vmatprep.subr.mxu0 0.0
        %534 = vmatpush1.xpose.msra.mxu0 0.0
        %535 = vmatprep.subr.mxu0 0.0
        %536 = vmatpush1.xpose.msra.mxu0 0.0
        %537 = vmatprep.subr.mxu0 0.0
        %538 = vmatpush1.xpose.msra.mxu0 0.0
        %539 = vmatprep.subr.mxu0 0.0
        %540 = vmatpush1.xpose.msra.mxu0 0.0
        %541 = vmatprep.subr.mxu0 0.0
        %542 = vmatpush1.xpose.msra.mxu0 0.0
        %543 = vmatprep.subr.mxu0 0.0
        %544 = vmatpush1.xpose.msra.mxu0 0.0
        %545 = vmatprep.subr.mxu0 0.0
        %546 = vmatpush1.xpose.msra.mxu0 0.0
        %547 = vmatprep.subr.mxu0 0.0
        %548 = vmatpush1.xpose.msra.mxu0 0.0
        %549 = vmatprep.subr.mxu0 0.0
        %550 = vmatpush1.xpose.msra.mxu0 0.0
        %551 = vmatprep.subr.mxu0 0.0
        %552 = vmatpush1.xpose.msra.mxu0 0.0
        %553 = vmatprep.subr.mxu0 0.0
        %554 = vmatpush1.xpose.msra.mxu0 %v521
        %555 = vmatprep.subr.mxu0 0.0
        %556 = vmatpush2.xpose.msra.mxu0 0.0
        %557 = vmatprep.subr.mxu0 0.0
        %558 = vmatpush2.xpose.msra.mxu0 0.0
        %559 = vmatprep.subr.mxu0 0.0
        %560 = vmatpush2.xpose.msra.mxu0 0.0
        %561 = vmatprep.subr.mxu0 0.0
        %562 = vmatpush2.xpose.msra.mxu0 0.0
        %563 = vmatprep.subr.mxu0 0.0
        %564 = vmatpush2.xpose.msra.mxu0 0.0
        %565 = vmatprep.subr.mxu0 0.0
        %566 = vmatpush2.xpose.msra.mxu0 0.0
        %567 = vmatprep.subr.mxu0 0.0
        %568 = vmatpush2.xpose.msra.mxu0 0.0
        %569 = vmatprep.subr.mxu0 0.0
        %570 = vmatpush2.xpose.msra.mxu0 0.0
        %571 = vmatprep.subr.mxu0 0.0
        %572 = vmatpush2.xpose.msra.mxu0 0.0
        %573 = vmatprep.subr.mxu0 0.0
        %574 = vmatpush2.xpose.msra.mxu0 0.0
        %575 = vmatprep.subr.mxu0 0.0
        %576 = vmatpush2.xpose.msra.mxu0 0.0
        %577 = vmatprep.subr.mxu0 0.0
        %578 = vmatpush2.xpose.msra.mxu0 0.0
        %579 = vmatprep.subr.mxu0 0.0
        %580 = vmatpush2.xpose.msra.mxu0 0.0
        %581 = vmatprep.subr.mxu0 0.0
        %582 = vmatpush2.xpose.msra.mxu0 0.0
        %583 = vmatprep.subr.mxu0 0.0
        %584 = vmatpush2.xpose.msra.mxu0 0.0
        %585 = vmatprep.subr.mxu0 0.0
        %586 = vmatpush2.xpose.msra.mxu0 0.0
        %587 = vmatprep.mubr.f32.mxu0 0.0
        %588 = vmatmul.mubr.f32.gmra.mxu0 %v518
        %v589 = vpop.f32.mrf.mxu0
        %v590 = vadd.f32 0.0, %v589
        %v591 = vpop.f32.mrf.mxu0
        %592 = vdwg.mxu0
        %v593 = vmul.f32 %v590, 0.35355338
        %v594 = vsel %vm516, %v593, -inf
        %595 = vmax.xlane.f32.xlu0 %v594
        %v596 = vpop.xlane.xlu0 %595
        %v597 = vsub.f32 %v593, %v596
        %v598 = vmul.f32 %v597, 1.442695
        %v599 = vpow.pop %v598
        %v600 = vsel %vm516, %v599, 0.0
        %601 = vadd.xlane.f32.xlu0 %v600
        %v602 = vpop.xlane.xlu0 %601
        %v603 = vrcp.pop %v602
        %v604 = vmul.f32 %v599, %v603
        %s605 = scalar_lea.vmem [#allocation4], %s511
        %v606 = vld [vmem:[%s605] sm:$0xff]
        %v608 = vsel %vm516, %v604, 0
        %610 = vmatprep.subr.mxu0 0.0
        %611 = vmatpush1.msra.mxu0 0.0
        %612 = vmatprep.subr.mxu0 0.0
        %613 = vmatpush1.msra.mxu0 0.0
        %614 = vmatprep.subr.mxu0 0.0
        %615 = vmatpush1.msra.mxu0 0.0
        %616 = vmatprep.subr.mxu0 0.0
        %617 = vmatpush1.msra.mxu0 0.0
        %618 = vmatprep.subr.mxu0 0.0
        %619 = vmatpush1.msra.mxu0 0.0
        %620 = vmatprep.subr.mxu0 0.0
        %621 = vmatpush1.msra.mxu0 0.0
        %622 = vmatprep.subr.mxu0 0.0
        %623 = vmatpush1.msra.mxu0 0.0
        %624 = vmatprep.subr.mxu0 0.0
        %625 = vmatpush1.msra.mxu0 0.0
        %626 = vmatprep.subr.mxu0 0.0
        %627 = vmatpush1.msra.mxu0 0.0
        %628 = vmatprep.subr.mxu0 0.0
        %629 = vmatpush1.msra.mxu0 0.0
        %630 = vmatprep.subr.mxu0 0.0
        %631 = vmatpush1.msra.mxu0 0.0
        %632 = vmatprep.subr.mxu0 0.0
        %633 = vmatpush1.msra.mxu0 0.0
        %634 = vmatprep.subr.mxu0 0.0
        %635 = vmatpush1.msra.mxu0 0.0
        %636 = vmatprep.subr.mxu0 0.0
        %637 = vmatpush1.msra.mxu0 0.0
        %638 = vmatprep.subr.mxu0 0.0
        %639 = vmatpush1.msra.mxu0 0.0
        %640 = vmatprep.subr.mxu0 0.0
        %641 = vmatpush1.msra.mxu0 %v606
        %642 = vmatprep.subr.mxu0 0.0
        %643 = vmatpush2.msra.mxu0 0.0
        %644 = vmatprep.subr.mxu0 0.0
        %645 = vmatpush2.msra.mxu0 0.0
        %646 = vmatprep.subr.mxu0 0.0
        %647 = vmatpush2.msra.mxu0 0.0
        %648 = vmatprep.subr.mxu0 0.0
        %649 = vmatpush2.msra.mxu0 0.0
        %650 = vmatprep.subr.mxu0 0.0
        %651 = vmatpush2.msra.mxu0 0.0
        %652 = vmatprep.subr.mxu0 0.0
        %653 = vmatpush2.msra.mxu0 0.0
        %654 = vmatprep.subr.mxu0 0.0
        %655 = vmatpush2.msra.mxu0 0.0
        %656 = vmatprep.subr.mxu0 0.0
        %657 = vmatpush2.msra.mxu0 0.0
        %658 = vmatprep.subr.mxu0 0.0
        %659 = vmatpush2.msra.mxu0 0.0
        %660 = vmatprep.subr.mxu0 0.0
        %661 = vmatpush2.msra.mxu0 0.0
        %662 = vmatprep.subr.mxu0 0.0
        %663 = vmatpush2.msra.mxu0 0.0
        %664 = vmatprep.subr.mxu0 0.0
        %665 = vmatpush2.msra.mxu0 0.0
        %666 = vmatprep.subr.mxu0 0.0
        %667 = vmatpush2.msra.mxu0 0.0
        %668 = vmatprep.subr.mxu0 0.0
        %669 = vmatpush2.msra.mxu0 0.0
        %670 = vmatprep.subr.mxu0 0.0
        %671 = vmatpush2.msra.mxu0 0.0
        %672 = vmatprep.subr.mxu0 0.0
        %673 = vmatpush2.msra.mxu0 0.0
        %674 = vmatprep.mubr.f32.mxu0 0.0
        %675 = vmatmul.mubr.f32.gmra.mxu0 %v608
        %v676 = vpop.f32.mrf.mxu0
        %v677 = vadd.f32 0.0, %v676
        %v678 = vpop.f32.mrf.mxu0
        %679 = vdwg.mxu0
        %s680 = scalar_lea.vmem [#allocation5], %s511
        %681 = vst.msk [vmem:[%s680] sm:$0xff] %vm516, %v677
        %p682 = scmp.eq.s32.totalorder %s30, 3
        // Predicated region
        $region65: #{tpu_custom_call.1} parent=47 // pred_check
          %p683 = pneg %p682
        $region66: #{tpu_custom_call.1} parent=47 // pred_check_branch
          %685 = sbr.rel (%p683) target = $region68
        $region67: #{tpu_custom_call.1} parent=47 // pred_region
          %v686 = vld [vmem:[#allocation5] sm:$0xff]
          %s687 = scalar_lea.vmem [#allocation5], 8
          %v688 = vld [vmem:[%s687] sm:$0xff]
          %s689 = scalar_lea.vmem [#allocation5], 16
          %v690 = vld [vmem:[%s689] sm:$0xff]
          %s691 = scalar_lea.vmem [#allocation5], 24
          %v692 = vld [vmem:[%s691] sm:$0xff]
          %694 = vrot.lane.b32.xlu0 %v688, 8
          %v695 = vpop.permute.xlu0 %694
          %698 = vrot.lane.b32.xlu0 %v690, 16
          %v699 = vpop.permute.xlu0 %698
          %702 = vrot.lane.b32.xlu0 %v692, 24
          %v703 = vpop.permute.xlu0 %702
          %v705 = vsel %vm516, %v686, %v695
          %vm706 = vcmask 130048
          %v707 = vsel %vm706, %v705, %v699
          %vm708 = vcmask 195584
          %v709 = vsel %vm708, %v707, %v703
          %v710 = vld [vmem:[#allocation11] sm:$0xff]
          %v711 = vld [vmem:[#allocation11 + $0x8] sm:$0xff]
          %v712 = vld [vmem:[#allocation11 + $0x10] sm:$0xff]
          %v713 = vld [vmem:[#allocation11 + $0x18] sm:$0xff]
          %v714 = vld [vmem:[%s6] sm:$0x1]
          %v716 = vlaneseq
          %v717 = vshrl.u32 %v716, 7
          %v718 = vsub.s32 0, %v717
          %v719 = vrot.slane %v714, %v718
          %vm721 = vcmask 261120
          %v723 = vsel %vm721, %v709, 0
          %725 = vmatprep.subr.mxu0 0.0
          %726 = vmatpush1.msra.mxu0 0.0
          %727 = vmatprep.subr.mxu0 0.0
          %728 = vmatpush1.msra.mxu0 0.0
          %729 = vmatprep.subr.mxu0 0.0
          %730 = vmatpush1.msra.mxu0 0.0
          %731 = vmatprep.subr.mxu0 0.0
          %732 = vmatpush1.msra.mxu0 0.0
          %733 = vmatprep.subr.mxu0 0.0
          %734 = vmatpush1.msra.mxu0 0.0
          %735 = vmatprep.subr.mxu0 0.0
          %736 = vmatpush1.msra.mxu0 0.0
          %737 = vmatprep.subr.mxu0 0.0
          %738 = vmatpush1.msra.mxu0 0.0
          %739 = vmatprep.subr.mxu0 0.0
          %740 = vmatpush1.msra.mxu0 0.0
          %741 = vmatprep.subr.mxu0 0.0
          %742 = vmatpush1.msra.mxu0 0.0
          %743 = vmatprep.subr.mxu0 0.0
          %744 = vmatpush1.msra.mxu0 0.0
          %745 = vmatprep.subr.mxu0 0.0
          %746 = vmatpush1.msra.mxu0 0.0
          %747 = vmatprep.subr.mxu0 0.0
          %748 = vmatpush1.msra.mxu0 0.0
          %749 = vmatprep.subr.mxu0 0.0
          %750 = vmatpush1.msra.mxu0 %v713
          %751 = vmatprep.subr.mxu0 0.0
          %752 = vmatpush1.msra.mxu0 %v712
          %753 = vmatprep.subr.mxu0 0.0
          %754 = vmatpush1.msra.mxu0 %v711
          %755 = vmatprep.subr.mxu0 0.0
          %756 = vmatpush1.msra.mxu0 %v710
          %757 = vmatprep.subr.mxu0 0.0
          %758 = vmatpush2.msra.mxu0 0.0
          %759 = vmatprep.subr.mxu0 0.0
          %760 = vmatpush2.msra.mxu0 0.0
          %761 = vmatprep.subr.mxu0 0.0
          %762 = vmatpush2.msra.mxu0 0.0
          %763 = vmatprep.subr.mxu0 0.0
          %764 = vmatpush2.msra.mxu0 0.0
          %765 = vmatprep.subr.mxu0 0.0
          %766 = vmatpush2.msra.mxu0 0.0
          %767 = vmatprep.subr.mxu0 0.0
          %768 = vmatpush2.msra.mxu0 0.0
          %769 = vmatprep.subr.mxu0 0.0
          %770 = vmatpush2.msra.mxu0 0.0
          %771 = vmatprep.subr.mxu0 0.0
          %772 = vmatpush2.msra.mxu0 0.0
          %773 = vmatprep.subr.mxu0 0.0
          %774 = vmatpush2.msra.mxu0 0.0
          %775 = vmatprep.subr.mxu0 0.0
          %776 = vmatpush2.msra.mxu0 0.0
          %777 = vmatprep.subr.mxu0 0.0
          %778 = vmatpush2.msra.mxu0 0.0
          %779 = vmatprep.subr.mxu0 0.0
          %780 = vmatpush2.msra.mxu0 0.0
          %781 = vmatprep.subr.mxu0 0.0
          %782 = vmatpush2.msra.mxu0 0.0
          %783 = vmatprep.subr.mxu0 0.0
          %784 = vmatpush2.msra.mxu0 0.0
          %785 = vmatprep.subr.mxu0 0.0
          %786 = vmatpush2.msra.mxu0 0.0
          %787 = vmatprep.subr.mxu0 0.0
          %788 = vmatpush2.msra.mxu0 0.0
          %789 = vmatprep.mubr.f32.mxu0 0.0
          %790 = vmatmul.mubr.f32.gmra.mxu0 %v723
          %v791 = vpop.f32.mrf.mxu0
          %v792 = vadd.f32 %v719, %v791
          %v793 = vpop.f32.mrf.mxu0
          %794 = vdwg.mxu0
          %v795 = vld [vmem:[%s296] sm:$0xff]
          %v796 = vadd.f32 %v792, %v795
          %797 = vst.msk [vmem:[%s334] sm:$0xff] %vm721, %v796
        $region68: #{tpu_custom_call.1} parent=47 // pred_fallthru
          _
        %s798 = sand.u32 %s197, 1
        %s799 = scalar_lea.sflag [#allocation8], %s798
        %s800 = sand.u32 %s197, 1
        %s801 = smul.addr %s800, 8
        %s802 = scalar_lea.vmem [#allocation12], %s801
        // Predicated region
        $region69: #{tpu_custom_call.1} parent=47 // pred_check
          %p803 = pneg %p207
        $region70: #{tpu_custom_call.1} parent=47 // pred_check_branch
          %805 = sbr.rel (%p803) target = $region72
        $region71: #{tpu_custom_call.1} parent=47 // pred_region
          %s807 = ssub.s32 128, 128
          %808 = vsyncadd %s799, %s807
          %s809 = smul.addr %s29, 128
          %s810 = scalar_lea.hbm %s7, %s809
          %s812 = sshll.u32 %s802, 4
          %s813 = int_to_ptr.vmem [resolvable:$true] %s812
          %815 = dma.vmem_to_hbm [thread:$0]  %s813, 128, %s810, %s799
        $region72: #{tpu_custom_call.1} parent=47 // pred_fallthru
          _
      $region48: #{tpu_custom_call.1} parent=5 // pred_fallthru
        _
      %p816 = scmp.le.s32.totalorder 2, %s20
      // Predicated region
      $region73: #{tpu_custom_call.1} parent=5 // pred_check
        %p817 = pneg %p816
      $region74: #{tpu_custom_call.1} parent=5 // pred_check_branch
        %819 = sbr.rel (%p817) target = $region76
      $region75: #{tpu_custom_call.1} parent=5 // pred_region
        %s820 = ssub.s32 %s20, 2
        // Predicated region
        $region77: #{tpu_custom_call.1} parent=75 // pred_check
          %p821 = pneg %p213
        $region78: #{tpu_custom_call.1} parent=75 // pred_check_branch
          %823 = sbr.rel (%p821) target = $region80
        $region79: #{tpu_custom_call.1} parent=75 // pred_region
          %s824 = sand.u32 %s198, 1
          %s825 = scalar_lea.sflag [#allocation8], %s824
          %s826 = sand.u32 %s198, 1
          %s827 = smul.addr %s826, 8
          %s828 = scalar_lea.vmem [#allocation12], %s827
          %829 = dma.done %s825, 128
        $region80: #{tpu_custom_call.1} parent=75 // pred_fallthru
          _
      $region76: #{tpu_custom_call.1} parent=5 // pred_fallthru
        _
    $region6: #{tpu_custom_call.1} parent=1 // loop_footer
      %s24 = sadd.s32 1, %s20
    $region7: #{tpu_custom_call.1} parent=1 // loop_footer_branch
      %19 = sbr.rel target = $region3
    $region8: #{tpu_custom_call.1} parent=1 // loop_exit
      _
    %830 = vsyncpa [#allocation7], 1
    %s831 = scalar_lea.sflag [#allocation7], 1
    %832 = vsyncpa %s831, 1
    %833 = vsyncpa [#allocation10], 1
    %834 = vsyncpa [#allocation8], 1
    %s835 = scalar_lea.sflag [#allocation8], 1
    %836 = vsyncpa %s835, 1

</llo_original>
